<compile_context>
chip_gen: v6e
topology: v6e:2x2x1
jax: 0.10.0
libtpu: 0.0.40
codegen_flags: <defaults>
</compile_context>

<pallas_src>
import jax
import jax.numpy as jnp
from jax.experimental import pallas as pl
from jax.experimental.pallas import tpu as pltpu

INPUT_DIM = 5
H1 = 64
H2 = 32
OUT = 1

VMEM_LIMIT_BYTES = 48 << 20  # > v5e's 16 MiB default scoped cap, < v7x's 64 MiB physical


def _round_up(n, m):
    return ((n + m - 1) // m) * m


def _default_tile_max():
    """Largest batch tile (lane axis) per chip generation."""
    try:
        kind = jax.devices()[0].device_kind.lower()
    except Exception:
        return 16384
    if "v5" in kind:
        return 16384   # tightest scoped-VMEM defaults / single vst slot
    return 32768       # v6e / v7x: ~20 MiB peak VMEM, well under the 48 MiB cap


_TB_MAX = _default_tile_max()


def _choose_tile(B):
    """Pick (tb, Bp): lane-axis tile and padded batch."""
    b128 = _round_up(max(B, 1), 128)
    tb = min(_TB_MAX, b128)
    # Prefer >= 2 grid steps when the batch allows it so both v7x TensorCores
    # get work under dimension_semantics=("parallel",); harmless on v5e/v6e.
    if b128 > 128 and b128 // tb < 2:
        tb = _round_up(pl.cdiv(b128, 2), 128)
    Bp = _round_up(b128, tb)
    return tb, Bp


def _mlp_kernel(x_ref, w1_ref, b1_ref, w2_ref, b2_ref, w3_ref, b3_ref, o_ref):
    x = x_ref[...]                                                       # [5, TB]

    # fc1 (+ folded bn1) + relu
    h1 = jnp.dot(w1_ref[...], x, preferred_element_type=jnp.float32)    # [64, TB]
    h1 = jnp.maximum(h1 + b1_ref[...], 0.0)

    # dropout(p=0.3) is identity at inference time
    # TODO(synk): training-mode dropout (pltpu.prng_random_bits mask) not implemented.

    # fc2 (+ folded bn2) + relu
    h2 = jnp.dot(w2_ref[...], h1, preferred_element_type=jnp.float32)   # [32, TB]
    h2 = jnp.maximum(h2 + b2_ref[...], 0.0)

    # fc3 — lane-dense [1, TB] output
    y = jnp.dot(w3_ref[...], h2, preferred_element_type=jnp.float32)    # [1, TB]
    o_ref[...] = y + b3_ref[...]


def fold_batchnorm(params, eps=1e-5):
    """Fold BatchNorm running stats into the linear layers. Call ONCE at load time."""
    s1 = params["bn1_gamma"] / jnp.sqrt(params["bn1_var"] + eps)
    sh1 = params["bn1_beta"] - params["bn1_mean"] * s1
    s2 = params["bn2_gamma"] / jnp.sqrt(params["bn2_var"] + eps)
    sh2 = params["bn2_beta"] - params["bn2_mean"] * s2
    return dict(
        w1=(params["w1"] * s1[:, None]).astype(jnp.float32),            # [64, 5]
        b1=(params["b1"] * s1 + sh1).reshape(H1, 1).astype(jnp.float32),
        w2=(params["w2"] * s2[:, None]).astype(jnp.float32),            # [32, 64]
        b2=(params["b2"] * s2 + sh2).reshape(H2, 1).astype(jnp.float32),
        w3=params["w3"].astype(jnp.float32),                            # [1, 32]
        b3=params["b3"].reshape(OUT, 1).astype(jnp.float32),
    )


@jax.jit
def improved_nn_forward(x, folded):
    """x: [B, INPUT_DIM] float32. folded: output of fold_batchnorm(). Returns [B, 1]."""
    B = x.shape[0]
    tb, Bp = _choose_tile(B)

    # Batch-on-lanes layout: [INPUT_DIM, Bp]. Under jit the transpose+pad fuse
    # into one pass and the result feeds the pallas_call directly.
    xT = jnp.pad(x.T.astype(jnp.float32), ((0, 0), (0, Bp - B)))

    grid = (Bp // tb,)

    out = pl.pallas_call(
        _mlp_kernel,
        out_shape=jax.ShapeDtypeStruct((OUT, Bp), jnp.float32),
        grid=grid,
        in_specs=[
            pl.BlockSpec((INPUT_DIM, tb), lambda i: (0, i)),   # x tile (lane-dense)
            pl.BlockSpec((H1, INPUT_DIM), lambda i: (0, 0)),   # w1 (resident)
            pl.BlockSpec((H1, 1), lambda i: (0, 0)),           # b1
            pl.BlockSpec((H2, H1), lambda i: (0, 0)),          # w2
            pl.BlockSpec((H2, 1), lambda i: (0, 0)),           # b2
            pl.BlockSpec((OUT, H2), lambda i: (0, 0)),         # w3
            pl.BlockSpec((OUT, 1), lambda i: (0, 0)),          # b3
        ],
        out_specs=pl.BlockSpec((OUT, tb), lambda i: (0, i)),   # lane-dense output
        compiler_params=pltpu.CompilerParams(
            dimension_semantics=("parallel",),
            vmem_limit_bytes=VMEM_LIMIT_BYTES,
        ),
    )(
        xT,
        folded["w1"], folded["b1"],
        folded["w2"], folded["b2"],
        folded["w3"], folded["b3"],
    )

    # Back to PyTorch convention [B, 1]; drop batch padding.
    return out[:, :B].T


def init_params(key):
    """Deterministic parameter init mirroring the shapes in ImprovedNN.__init__."""
    ks = jax.random.split(key, 10)

    def linear_init(kw, kb, fan_in, fan_out):
        bound = 1.0 / jnp.sqrt(fan_in)
        w = jax.random.uniform(kw, (fan_out, fan_in), jnp.float32, -bound, bound)
        b = jax.random.uniform(kb, (fan_out,), jnp.float32, -bound, bound)
        return w, b

    w1, b1 = linear_init(ks[0], ks[1], INPUT_DIM, H1)
    w2, b2 = linear_init(ks[2], ks[3], H1, H2)
    w3, b3 = linear_init(ks[4], ks[5], H2, OUT)

    # BatchNorm1d defaults: gamma=1, beta=0, running_mean=0, running_var=1.
    # Perturb mean/var deterministically so the BN fold is actually exercised.
    m1 = 0.05 * jax.random.normal(ks[6], (H1,), jnp.float32)
    v1 = jnp.ones((H1,), jnp.float32) + 0.1 * jnp.abs(jax.random.normal(ks[7], (H1,)))
    m2 = 0.05 * jax.random.normal(ks[8], (H2,), jnp.float32)
    v2 = jnp.ones((H2,), jnp.float32) + 0.1 * jnp.abs(jax.random.normal(ks[9], (H2,)))

    return dict(
        w1=w1, b1=b1,
        bn1_gamma=jnp.ones((H1,), jnp.float32), bn1_beta=jnp.zeros((H1,), jnp.float32),
        bn1_mean=m1, bn1_var=v1,
        w2=w2, b2=b2,
        bn2_gamma=jnp.ones((H2,), jnp.float32), bn2_beta=jnp.zeros((H2,), jnp.float32),
        bn2_mean=m2, bn2_var=v2,
        w3=w3, b3=b3,
    )


def _reference(x, params):
    eps = 1e-5
    h = x @ params["w1"].T + params["b1"]
    h = (h - params["bn1_mean"]) / jnp.sqrt(params["bn1_var"] + eps) \
        * params["bn1_gamma"] + params["bn1_beta"]
    h = jnp.maximum(h, 0.0)
    h = h @ params["w2"].T + params["b2"]
    h = (h - params["bn2_mean"]) / jnp.sqrt(params["bn2_var"] + eps) \
        * params["bn2_gamma"] + params["bn2_beta"]
    h = jnp.maximum(h, 0.0)
    return h @ params["w3"].T + params["b3"]


if __name__ == "__main__":
    key = jax.random.PRNGKey(0)
    kx, kp, kx2 = jax.random.split(key, 3)

    params = init_params(kp)
    folded = fold_batchnorm(params)   # one-time, model-load-time fold

    # Test 1: small batch (single tile, grid=(1,)).
    B = 8
    x = jax.random.normal(kx, (B, INPUT_DIM), jnp.float32)
    y = jax.block_until_ready(improved_nn_forward(x, folded))
    y_ref = _reference(x, params)
    assert y.shape == (B, OUT)
    assert jnp.allclose(y, y_ref, atol=1e-5, rtol=1e-5)

    # Test 2: multi-tile batch, not a multiple of 128 (exercises index_map,
    # padding and the >=2-grid-step path used for v7x megacore).
    B2 = 300
    x2 = jax.random.normal(kx2, (B2, INPUT_DIM), jnp.float32)
    y2 = jax.block_until_ready(improved_nn_forward(x2, folded))
    y2_ref = _reference(x2, params)
    assert y2.shape == (B2, OUT)
    assert jnp.allclose(y2, y2_ref, atol=1e-5, rtol=1e-5)

    print("KERNEL_OK")
</pallas_src>

<mosaic_0001>
module attributes {stable_mosaic.version = 11 : i64} {
  func.func @_mlp_kernel(%arg0: i32, %arg1: memref<5x128xf32, #tpu.memory_space<vmem>>, %arg2: memref<64x5xf32, #tpu.memory_space<vmem>>, %arg3: memref<64x1xf32, #tpu.memory_space<vmem>>, %arg4: memref<32x64xf32, #tpu.memory_space<vmem>>, %arg5: memref<32x1xf32, #tpu.memory_space<vmem>>, %arg6: memref<1x32xf32, #tpu.memory_space<vmem>>, %arg7: memref<1x1xf32, #tpu.memory_space<vmem>>, %arg8: memref<1x128xf32, #tpu.memory_space<vmem>>) attributes {dimension_semantics = [#tpu.dimension_semantics<parallel>], iteration_bounds = array<i64: 1>, scalar_prefetch = 0 : i64, scratch_operands = 0 : i64, tpu.core_type = #tpu.core_type<tc>, window_params = [{transform_indices = @transform_0, window_bounds = array<i64: 5, 128>}, {pipeline_mode = #tpu.pipeline_mode<synchronous>, transform_indices = @transform_1, window_bounds = array<i64: 64, 5>}, {pipeline_mode = #tpu.pipeline_mode<synchronous>, transform_indices = @transform_2, window_bounds = array<i64: 64, 1>}, {pipeline_mode = #tpu.pipeline_mode<synchronous>, transform_indices = @transform_3, window_bounds = array<i64: 32, 64>}, {pipeline_mode = #tpu.pipeline_mode<synchronous>, transform_indices = @transform_4, window_bounds = array<i64: 32, 1>}, {pipeline_mode = #tpu.pipeline_mode<synchronous>, transform_indices = @transform_5, window_bounds = array<i64: 1, 32>}, {pipeline_mode = #tpu.pipeline_mode<synchronous>, transform_indices = @transform_6, window_bounds = array<i64: 1, 1>}, {transform_indices = @transform_7, window_bounds = array<i64: 1, 128>}]} {
    %c0 = arith.constant 0 : index
    %c0_0 = arith.constant 0 : index
    %0 = vector.load %arg1[%c0, %c0_0] : memref<5x128xf32, #tpu.memory_space<vmem>>, vector<5x128xf32>
    %c0_1 = arith.constant 0 : index
    %c0_2 = arith.constant 0 : index
    %1 = vector.load %arg2[%c0_1, %c0_2] : memref<64x5xf32, #tpu.memory_space<vmem>>, vector<64x5xf32>
    %cst = arith.constant dense<0.000000e+00> : vector<64x128xf32>
    %2 = tpu.matmul %1, %0, %cst {dimension_numbers = #tpu.dot_dimension_numbers<[1], [0], [0], [1], [0, 0, 1, 1], [], []>} : vector<64x5xf32>, vector<5x128xf32>, vector<64x128xf32> -> vector<64x128xf32>
    %c0_3 = arith.constant 0 : index
    %c0_4 = arith.constant 0 : index
    %3 = vector.load %arg3[%c0_3, %c0_4] : memref<64x1xf32, #tpu.memory_space<vmem>>, vector<64x1xf32>
    %4 = vector.broadcast %3 : vector<64x1xf32> to vector<64x128xf32>
    %5 = arith.addf %2, %4 : vector<64x128xf32>
    %cst_5 = arith.constant 0.000000e+00 : f32
    %6 = vector.broadcast %cst_5 : f32 to vector<64x128xf32>
    %7 = arith.maximumf %5, %6 : vector<64x128xf32>
    %c0_6 = arith.constant 0 : index
    %c0_7 = arith.constant 0 : index
    %8 = vector.load %arg4[%c0_6, %c0_7] : memref<32x64xf32, #tpu.memory_space<vmem>>, vector<32x64xf32>
    %cst_8 = arith.constant dense<0.000000e+00> : vector<32x128xf32>
    %9 = tpu.matmul %8, %7, %cst_8 {dimension_numbers = #tpu.dot_dimension_numbers<[1], [0], [0], [1], [0, 0, 1, 1], [], []>} : vector<32x64xf32>, vector<64x128xf32>, vector<32x128xf32> -> vector<32x128xf32>
    %c0_9 = arith.constant 0 : index
    %c0_10 = arith.constant 0 : index
    %10 = vector.load %arg5[%c0_9, %c0_10] : memref<32x1xf32, #tpu.memory_space<vmem>>, vector<32x1xf32>
    %11 = vector.broadcast %10 : vector<32x1xf32> to vector<32x128xf32>
    %12 = arith.addf %9, %11 : vector<32x128xf32>
    %cst_11 = arith.constant 0.000000e+00 : f32
    %13 = vector.broadcast %cst_11 : f32 to vector<32x128xf32>
    %14 = arith.maximumf %12, %13 : vector<32x128xf32>
    %c0_12 = arith.constant 0 : index
    %c0_13 = arith.constant 0 : index
    %15 = vector.load %arg6[%c0_12, %c0_13] : memref<1x32xf32, #tpu.memory_space<vmem>>, vector<1x32xf32>
    %cst_14 = arith.constant dense<0.000000e+00> : vector<1x128xf32>
    %16 = tpu.matmul %15, %14, %cst_14 {dimension_numbers = #tpu.dot_dimension_numbers<[1], [0], [0], [1], [0, 0, 1, 1], [], []>} : vector<1x32xf32>, vector<32x128xf32>, vector<1x128xf32> -> vector<1x128xf32>
    %c0_15 = arith.constant 0 : index
    %c0_16 = arith.constant 0 : index
    %17 = vector.load %arg7[%c0_15, %c0_16] : memref<1x1xf32, #tpu.memory_space<vmem>>, vector<1x1xf32>
    %18 = vector.broadcast %17 : vector<1x1xf32> to vector<1x128xf32>
    %19 = arith.addf %16, %18 : vector<1x128xf32>
    %c0_17 = arith.constant 0 : index
    %c0_18 = arith.constant 0 : index
    %20 = vector.load %arg8[%c0_17, %c0_18] : memref<1x128xf32, #tpu.memory_space<vmem>>, vector<1x128xf32>
    tpu.vector_store %arg8[%c0_17, %c0_18], %19 {strides = array<i32>} : memref<1x128xf32, #tpu.memory_space<vmem>>, vector<1x128xf32>,
    return
  }
  func.func @transform_0(%arg0: i32) -> (i32, i32) {
    %c0_i32 = arith.constant 0 : i32
    %c0_i32_0 = arith.constant 0 : i32
    return %c0_i32, %arg0 : i32, i32
  }
  func.func @transform_1(%arg0: i32) -> (i32, i32) {
    %c0_i32 = arith.constant 0 : i32
    %c0_i32_0 = arith.constant 0 : i32
    %c0_i32_1 = arith.constant 0 : i32
    return %c0_i32, %c0_i32_0 : i32, i32
  }
  func.func @transform_2(%arg0: i32) -> (i32, i32) {
    %c0_i32 = arith.constant 0 : i32
    %c0_i32_0 = arith.constant 0 : i32
    %c0_i32_1 = arith.constant 0 : i32
    return %c0_i32, %c0_i32_0 : i32, i32
  }
  func.func @transform_3(%arg0: i32) -> (i32, i32) {
    %c0_i32 = arith.constant 0 : i32
    %c0_i32_0 = arith.constant 0 : i32
    %c0_i32_1 = arith.constant 0 : i32
    return %c0_i32, %c0_i32_0 : i32, i32
  }
  func.func @transform_4(%arg0: i32) -> (i32, i32) {
    %c0_i32 = arith.constant 0 : i32
    %c0_i32_0 = arith.constant 0 : i32
    %c0_i32_1 = arith.constant 0 : i32
    return %c0_i32, %c0_i32_0 : i32, i32
  }
  func.func @transform_5(%arg0: i32) -> (i32, i32) {
    %c0_i32 = arith.constant 0 : i32
    %c0_i32_0 = arith.constant 0 : i32
    %c0_i32_1 = arith.constant 0 : i32
    return %c0_i32, %c0_i32_0 : i32, i32
  }
  func.func @transform_6(%arg0: i32) -> (i32, i32) {
    %c0_i32 = arith.constant 0 : i32
    %c0_i32_0 = arith.constant 0 : i32
    %c0_i32_1 = arith.constant 0 : i32
    return %c0_i32, %c0_i32_0 : i32, i32
  }
  func.func @transform_7(%arg0: i32) -> (i32, i32) {
    %c0_i32 = arith.constant 0 : i32
    %c0_i32_0 = arith.constant 0 : i32
    return %c0_i32, %arg0 : i32, i32
  }
}

</mosaic_0001>

<llo_original>
// kernel: improved_nn_forward.1
$region0: #{improved_nn_forward.1}
  #allocation0 [shape = 'u32[]', space=smem, size = 0x4, offset = 0x4, fixed_abs, tag = 'smem constant byte address 0x4 - core index']
  #allocation1 [shape = 'u32[144,128]{1,0:T(1,128)}', space=vmem, size = 0x12000, scoped, tag = 'internal scratch']
  #allocation2 [shape = 'f32[1,1]{1,0:T(1,128)S(1)}', space=vmem, size = 0x200, scoped, tag = 'scoped memory for improved_nn_forward.1']
  %s0 = inlined_call_operand.vmem [shape: f32[5,128], index: 0, kind: input, shape index: {}]
  %s1 = inlined_call_operand.vmem [shape: f32[64,5], index: 1, kind: input, shape index: {}]
  %s2 = inlined_call_operand.vmem [shape: f32[64,1], index: 2, kind: input, shape index: {}]
  %s3 = inlined_call_operand.vmem [shape: f32[32,64], index: 3, kind: input, shape index: {}]
  %s4 = inlined_call_operand.vmem [shape: f32[32,1], index: 4, kind: input, shape index: {}]
  %s5 = inlined_call_operand.vmem [shape: f32[1,32], index: 5, kind: input, shape index: {}]
  %s6 = inlined_call_operand.<no memory space> [shape: f32[1,1], index: 6, kind: input, shape index: {}]
  %s7 = inlined_call_operand.vmem [shape: f32[1,128], index: 7, kind: output, shape index: {}]
  %s8 = sld [smem:[#allocation0]]
  $region38: #{improved_nn_forward.1} parent=0
    _
  %s10 = ssub.s32 1, %s8
  %s11 = scalar_select 0, %s10, %s8
  %v12 = vstv %s6
  %13 = vst [vmem:[#allocation2] sm:$0x1] %v12
  // Predicated region
  $region2: #{improved_nn_forward.1} parent=0 // pred_check
    _
  $region3: #{improved_nn_forward.1} parent=0 // pred_check_branch
    %15 = sbr.rel (0) target = $region5
  $region4: #{improved_nn_forward.1} parent=0 // pred_region
    _
  $region5: #{improved_nn_forward.1} parent=0 // pred_fallthru
    _
  // Predicated region
  $region6: #{improved_nn_forward.1} parent=0 // pred_check
    _
  $region7: #{improved_nn_forward.1} parent=0 // pred_check_branch
    %17 = sbr.rel (0) target = $region9
  $region8: #{improved_nn_forward.1} parent=0 // pred_region
    _
  $region9: #{improved_nn_forward.1} parent=0 // pred_fallthru
    _
  // Predicated region
  $region10: #{improved_nn_forward.1} parent=0 // pred_check
    _
  $region11: #{improved_nn_forward.1} parent=0 // pred_check_branch
    %19 = sbr.rel (0) target = $region13
  $region12: #{improved_nn_forward.1} parent=0 // pred_region
    _
  $region13: #{improved_nn_forward.1} parent=0 // pred_fallthru
    _
  // Predicated region
  $region14: #{improved_nn_forward.1} parent=0 // pred_check
    _
  $region15: #{improved_nn_forward.1} parent=0 // pred_check_branch
    %21 = sbr.rel (0) target = $region17
  $region16: #{improved_nn_forward.1} parent=0 // pred_region
    _
  $region17: #{improved_nn_forward.1} parent=0 // pred_fallthru
    _
  // Predicated region
  $region18: #{improved_nn_forward.1} parent=0 // pred_check
    _
  $region19: #{improved_nn_forward.1} parent=0 // pred_check_branch
    %23 = sbr.rel (0) target = $region21
  $region20: #{improved_nn_forward.1} parent=0 // pred_region
    _
  $region21: #{improved_nn_forward.1} parent=0 // pred_fallthru
    _
  // Predicated region
  $region22: #{improved_nn_forward.1} parent=0 // pred_check
    _
  $region23: #{improved_nn_forward.1} parent=0 // pred_check_branch
    %25 = sbr.rel (0) target = $region25
  $region24: #{improved_nn_forward.1} parent=0 // pred_region
    _
  $region25: #{improved_nn_forward.1} parent=0 // pred_fallthru
    _
  // Predicated region
  $region26: #{improved_nn_forward.1} parent=0 // pred_check
    _
  $region27: #{improved_nn_forward.1} parent=0 // pred_check_branch
    %27 = sbr.rel (0) target = $region29
  $region28: #{improved_nn_forward.1} parent=0 // pred_region
    _
  $region29: #{improved_nn_forward.1} parent=0 // pred_fallthru
    _
  %v28 = vld [vmem:[%s0] sm:$0x1f]
  %v29 = vld [vmem:[%s1] sm:$0xff]
  %v30 = vld [vmem:[%s1 + $0x8] sm:$0xff]
  %v31 = vld [vmem:[%s1 + $0x10] sm:$0xff]
  %v32 = vld [vmem:[%s1 + $0x18] sm:$0xff]
  %v33 = vld [vmem:[%s1 + $0x20] sm:$0xff]
  %v34 = vld [vmem:[%s1 + $0x28] sm:$0xff]
  %v35 = vld [vmem:[%s1 + $0x30] sm:$0xff]
  %v36 = vld [vmem:[%s1 + $0x38] sm:$0xff]
  %v37 = vld [vmem:[%s2] sm:$0xff]
  %v38 = vld [vmem:[%s2 + $0x8] sm:$0xff]
  %v39 = vld [vmem:[%s2 + $0x10] sm:$0xff]
  %v40 = vld [vmem:[%s2 + $0x18] sm:$0xff]
  %v41 = vld [vmem:[%s2 + $0x20] sm:$0xff]
  %v42 = vld [vmem:[%s2 + $0x28] sm:$0xff]
  %v43 = vld [vmem:[%s2 + $0x30] sm:$0xff]
  %v44 = vld [vmem:[%s2 + $0x38] sm:$0xff]
  %46 = vset.pattern.permute.xlu0 0
  %47 = vperm.xlu0 %46, %v37
  %v48 = vpop.permute.xlu0 %47
  %51 = vset.pattern.permute.xlu0 0
  %52 = vperm.xlu0 %51, %v38
  %v53 = vpop.permute.xlu0 %52
  %56 = vset.pattern.permute.xlu0 0
  %57 = vperm.xlu0 %56, %v39
  %v58 = vpop.permute.xlu0 %57
  %61 = vset.pattern.permute.xlu0 0
  %62 = vperm.xlu0 %61, %v40
  %v63 = vpop.permute.xlu0 %62
  %66 = vset.pattern.permute.xlu0 0
  %67 = vperm.xlu0 %66, %v41
  %v68 = vpop.permute.xlu0 %67
  %71 = vset.pattern.permute.xlu0 0
  %72 = vperm.xlu0 %71, %v42
  %v73 = vpop.permute.xlu0 %72
  %76 = vset.pattern.permute.xlu0 0
  %77 = vperm.xlu0 %76, %v43
  %v78 = vpop.permute.xlu0 %77
  %81 = vset.pattern.permute.xlu0 0
  %82 = vperm.xlu0 %81, %v44
  %v83 = vpop.permute.xlu0 %82
  %vm85 = vcmask 39936
  %v87 = vsel %vm85, %v29, 0
  %v90 = vsel %vm85, %v30, 0
  %v93 = vsel %vm85, %v31, 0
  %v96 = vsel %vm85, %v32, 0
  %v99 = vsel %vm85, %v33, 0
  %v102 = vsel %vm85, %v34, 0
  %v105 = vsel %vm85, %v35, 0
  %v108 = vsel %vm85, %v36, 0
  %vm110 = vcmask 1044480
  %v112 = vsel %vm110, %v28, 0
  %114 = vmatprep.subr.mxu0 0.0
  %115 = vmatpush1.msra.mxu0 0.0
  %116 = vmatprep.subr.mxu0 0.0
  %117 = vmatpush1.msra.mxu0 0.0
  %118 = vmatprep.subr.mxu0 0.0
  %119 = vmatpush1.msra.mxu0 0.0
  %120 = vmatprep.subr.mxu0 0.0
  %121 = vmatpush1.msra.mxu0 0.0
  %122 = vmatprep.subr.mxu0 0.0
  %123 = vmatpush1.msra.mxu0 0.0
  %124 = vmatprep.subr.mxu0 0.0
  %125 = vmatpush1.msra.mxu0 0.0
  %126 = vmatprep.subr.mxu0 0.0
  %127 = vmatpush1.msra.mxu0 0.0
  %128 = vmatprep.subr.mxu0 0.0
  %129 = vmatpush1.msra.mxu0 0.0
  %130 = vmatprep.subr.mxu0 0.0
  %131 = vmatpush1.msra.mxu0 0.0
  %132 = vmatprep.subr.mxu0 0.0
  %133 = vmatpush1.msra.mxu0 0.0
  %134 = vmatprep.subr.mxu0 0.0
  %135 = vmatpush1.msra.mxu0 0.0
  %136 = vmatprep.subr.mxu0 0.0
  %137 = vmatpush1.msra.mxu0 0.0
  %138 = vmatprep.subr.mxu0 0.0
  %139 = vmatpush1.msra.mxu0 0.0
  %140 = vmatprep.subr.mxu0 0.0
  %141 = vmatpush1.msra.mxu0 0.0
  %142 = vmatprep.subr.mxu0 0.0
  %143 = vmatpush1.msra.mxu0 0.0
  %144 = vmatprep.subr.mxu0 0.0
  %145 = vmatpush1.msra.mxu0 %v112
  %146 = vmatprep.subr.mxu0 0.0
  %147 = vmatpush2.msra.mxu0 0.0
  %148 = vmatprep.subr.mxu0 0.0
  %149 = vmatpush2.msra.mxu0 0.0
  %150 = vmatprep.subr.mxu0 0.0
  %151 = vmatpush2.msra.mxu0 0.0
  %152 = vmatprep.subr.mxu0 0.0
  %153 = vmatpush2.msra.mxu0 0.0
  %154 = vmatprep.subr.mxu0 0.0
  %155 = vmatpush2.msra.mxu0 0.0
  %156 = vmatprep.subr.mxu0 0.0
  %157 = vmatpush2.msra.mxu0 0.0
  %158 = vmatprep.subr.mxu0 0.0
  %159 = vmatpush2.msra.mxu0 0.0
  %160 = vmatprep.subr.mxu0 0.0
  %161 = vmatpush2.msra.mxu0 0.0
  %162 = vmatprep.subr.mxu0 0.0
  %163 = vmatpush2.msra.mxu0 0.0
  %164 = vmatprep.subr.mxu0 0.0
  %165 = vmatpush2.msra.mxu0 0.0
  %166 = vmatprep.subr.mxu0 0.0
  %167 = vmatpush2.msra.mxu0 0.0
  %168 = vmatprep.subr.mxu0 0.0
  %169 = vmatpush2.msra.mxu0 0.0
  %170 = vmatprep.subr.mxu0 0.0
  %171 = vmatpush2.msra.mxu0 0.0
  %172 = vmatprep.subr.mxu0 0.0
  %173 = vmatpush2.msra.mxu0 0.0
  %174 = vmatprep.subr.mxu0 0.0
  %175 = vmatpush2.msra.mxu0 0.0
  %176 = vmatprep.subr.mxu0 0.0
  %177 = vmatpush2.msra.mxu0 0.0
  %178 = vmatprep.mubr.f32.mxu0 0.0
  %179 = vmatmul.mubr.f32.gmra.mxu0 %v87
  %v180 = vpop.f32.mrf.mxu0
  %v181 = vadd.f32 %v48, %v180
  %v182 = vpop.f32.mrf.mxu0
  %183 = vmatprep.mubr.f32.mxu0 0.0
  %184 = vmatmul.mubr.f32.gmra.mxu0 %v90
  %v185 = vpop.f32.mrf.mxu0
  %v186 = vadd.f32 %v53, %v185
  %v187 = vpop.f32.mrf.mxu0
  %188 = vmatprep.mubr.f32.mxu0 0.0
  %189 = vmatmul.mubr.f32.gmra.mxu0 %v93
  %v190 = vpop.f32.mrf.mxu0
  %v191 = vadd.f32 %v58, %v190
  %v192 = vpop.f32.mrf.mxu0
  %193 = vmatprep.mubr.f32.mxu0 0.0
  %194 = vmatmul.mubr.f32.gmra.mxu0 %v96
  %v195 = vpop.f32.mrf.mxu0
  %v196 = vadd.f32 %v63, %v195
  %v197 = vpop.f32.mrf.mxu0
  %198 = vmatprep.mubr.f32.mxu0 0.0
  %199 = vmatmul.mubr.f32.gmra.mxu0 %v99
  %v200 = vpop.f32.mrf.mxu0
  %v201 = vadd.f32 %v68, %v200
  %v202 = vpop.f32.mrf.mxu0
  %203 = vmatprep.mubr.f32.mxu0 0.0
  %204 = vmatmul.mubr.f32.gmra.mxu0 %v102
  %v205 = vpop.f32.mrf.mxu0
  %v206 = vadd.f32 %v73, %v205
  %v207 = vpop.f32.mrf.mxu0
  %208 = vmatprep.mubr.f32.mxu0 0.0
  %209 = vmatmul.mubr.f32.gmra.mxu0 %v105
  %v210 = vpop.f32.mrf.mxu0
  %v211 = vadd.f32 %v78, %v210
  %v212 = vpop.f32.mrf.mxu0
  %213 = vmatprep.mubr.f32.mxu0 0.0
  %214 = vmatmul.mubr.f32.gmra.mxu0 %v108
  %v215 = vpop.f32.mrf.mxu0
  %v216 = vadd.f32 %v83, %v215
  %v217 = vpop.f32.mrf.mxu0
  %218 = vdwg.mxu0
  %v219 = vmax.f32 %v181, 0.0
  %v220 = vmax.f32 %v186, 0.0
  %v221 = vmax.f32 %v191, 0.0
  %v222 = vmax.f32 %v196, 0.0
  %v223 = vmax.f32 %v201, 0.0
  %v224 = vmax.f32 %v206, 0.0
  %v225 = vmax.f32 %v211, 0.0
  %v226 = vmax.f32 %v216, 0.0
  %v227 = vld [vmem:[%s3] sm:$0xff]
  %v228 = vld [vmem:[%s3 + $0x8] sm:$0xff]
  %v229 = vld [vmem:[%s3 + $0x10] sm:$0xff]
  %v230 = vld [vmem:[%s3 + $0x18] sm:$0xff]
  %v231 = vld [vmem:[%s4] sm:$0xff]
  %v232 = vld [vmem:[%s4 + $0x8] sm:$0xff]
  %v233 = vld [vmem:[%s4 + $0x10] sm:$0xff]
  %v234 = vld [vmem:[%s4 + $0x18] sm:$0xff]
  %236 = vset.pattern.permute.xlu0 0
  %237 = vperm.xlu0 %236, %v231
  %v238 = vpop.permute.xlu0 %237
  %241 = vset.pattern.permute.xlu0 0
  %242 = vperm.xlu0 %241, %v232
  %v243 = vpop.permute.xlu0 %242
  %246 = vset.pattern.permute.xlu0 0
  %247 = vperm.xlu0 %246, %v233
  %v248 = vpop.permute.xlu0 %247
  %251 = vset.pattern.permute.xlu0 0
  %252 = vperm.xlu0 %251, %v234
  %v253 = vpop.permute.xlu0 %252
  %vm255 = vcmask 523264
  %v257 = vsel %vm255, %v227, 0
  %v260 = vsel %vm255, %v228, 0
  %v263 = vsel %vm255, %v229, 0
  %v266 = vsel %vm255, %v230, 0
  %268 = vmatprep.subr.mxu0 0.0
  %269 = vmatpush1.msra.mxu0 0.0
  %270 = vmatprep.subr.mxu0 0.0
  %271 = vmatpush1.msra.mxu0 0.0
  %272 = vmatprep.subr.mxu0 0.0
  %273 = vmatpush1.msra.mxu0 0.0
  %274 = vmatprep.subr.mxu0 0.0
  %275 = vmatpush1.msra.mxu0 0.0
  %276 = vmatprep.subr.mxu0 0.0
  %277 = vmatpush1.msra.mxu0 0.0
  %278 = vmatprep.subr.mxu0 0.0
  %279 = vmatpush1.msra.mxu0 0.0
  %280 = vmatprep.subr.mxu0 0.0
  %281 = vmatpush1.msra.mxu0 0.0
  %282 = vmatprep.subr.mxu0 0.0
  %283 = vmatpush1.msra.mxu0 0.0
  %284 = vmatprep.subr.mxu0 0.0
  %285 = vmatpush1.msra.mxu0 %v226
  %286 = vmatprep.subr.mxu0 0.0
  %287 = vmatpush1.msra.mxu0 %v225
  %288 = vmatprep.subr.mxu0 0.0
  %289 = vmatpush1.msra.mxu0 %v224
  %290 = vmatprep.subr.mxu0 0.0
  %291 = vmatpush1.msra.mxu0 %v223
  %292 = vmatprep.subr.mxu0 0.0
  %293 = vmatpush1.msra.mxu0 %v222
  %294 = vmatprep.subr.mxu0 0.0
  %295 = vmatpush1.msra.mxu0 %v221
  %296 = vmatprep.subr.mxu0 0.0
  %297 = vmatpush1.msra.mxu0 %v220
  %298 = vmatprep.subr.mxu0 0.0
  %299 = vmatpush1.msra.mxu0 %v219
  %300 = vmatprep.subr.mxu0 0.0
  %301 = vmatpush2.msra.mxu0 0.0
  %302 = vmatprep.subr.mxu0 0.0
  %303 = vmatpush2.msra.mxu0 0.0
  %304 = vmatprep.subr.mxu0 0.0
  %305 = vmatpush2.msra.mxu0 0.0
  %306 = vmatprep.subr.mxu0 0.0
  %307 = vmatpush2.msra.mxu0 0.0
  %308 = vmatprep.subr.mxu0 0.0
  %309 = vmatpush2.msra.mxu0 0.0
  %310 = vmatprep.subr.mxu0 0.0
  %311 = vmatpush2.msra.mxu0 0.0
  %312 = vmatprep.subr.mxu0 0.0
  %313 = vmatpush2.msra.mxu0 0.0
  %314 = vmatprep.subr.mxu0 0.0
  %315 = vmatpush2.msra.mxu0 0.0
  %316 = vmatprep.subr.mxu0 0.0
  %317 = vmatpush2.msra.mxu0 0.0
  %318 = vmatprep.subr.mxu0 0.0
  %319 = vmatpush2.msra.mxu0 0.0
  %320 = vmatprep.subr.mxu0 0.0
  %321 = vmatpush2.msra.mxu0 0.0
  %322 = vmatprep.subr.mxu0 0.0
  %323 = vmatpush2.msra.mxu0 0.0
  %324 = vmatprep.subr.mxu0 0.0
  %325 = vmatpush2.msra.mxu0 0.0
  %326 = vmatprep.subr.mxu0 0.0
  %327 = vmatpush2.msra.mxu0 0.0
  %328 = vmatprep.subr.mxu0 0.0
  %329 = vmatpush2.msra.mxu0 0.0
  %330 = vmatprep.subr.mxu0 0.0
  %331 = vmatpush2.msra.mxu0 0.0
  %332 = vmatprep.mubr.f32.mxu0 0.0
  %333 = vmatmul.mubr.f32.gmra.mxu0 %v257
  %v334 = vpop.f32.mrf.mxu0
  %v335 = vadd.f32 %v238, %v334
  %v336 = vpop.f32.mrf.mxu0
  %337 = vmatprep.mubr.f32.mxu0 0.0
  %338 = vmatmul.mubr.f32.gmra.mxu0 %v260
  %v339 = vpop.f32.mrf.mxu0
  %v340 = vadd.f32 %v243, %v339
  %v341 = vpop.f32.mrf.mxu0
  %342 = vmatprep.mubr.f32.mxu0 0.0
  %343 = vmatmul.mubr.f32.gmra.mxu0 %v263
  %v344 = vpop.f32.mrf.mxu0
  %v345 = vadd.f32 %v248, %v344
  %v346 = vpop.f32.mrf.mxu0
  %347 = vmatprep.mubr.f32.mxu0 0.0
  %348 = vmatmul.mubr.f32.gmra.mxu0 %v266
  %v349 = vpop.f32.mrf.mxu0
  %v350 = vadd.f32 %v253, %v349
  %v351 = vpop.f32.mrf.mxu0
  %352 = vdwg.mxu0
  %v353 = vmax.f32 %v335, 0.0
  %v354 = vmax.f32 %v340, 0.0
  %v355 = vmax.f32 %v345, 0.0
  %v356 = vmax.f32 %v350, 0.0
  %v357 = vld [vmem:[%s5] sm:$0x1]
  %v358 = vld [vmem:[#allocation2] sm:$0x1]
  %360 = vset.pattern.permute.xlu0 0
  %361 = vperm.xlu0 %360, %v358
  %v362 = vpop.permute.xlu0 %361
  %v364 = vlaneseq
  %v365 = vshrl.u32 %v364, 7
  %v366 = vsub.s32 0, %v365
  %v367 = vrot.slane %v362, %v366
  %vm368 = vcmask 261120
  %v370 = vsel %vm368, %v357, 0
  %372 = vmatprep.subr.mxu0 0.0
  %373 = vmatpush1.msra.mxu0 0.0
  %374 = vmatprep.subr.mxu0 0.0
  %375 = vmatpush1.msra.mxu0 0.0
  %376 = vmatprep.subr.mxu0 0.0
  %377 = vmatpush1.msra.mxu0 0.0
  %378 = vmatprep.subr.mxu0 0.0
  %379 = vmatpush1.msra.mxu0 0.0
  %380 = vmatprep.subr.mxu0 0.0
  %381 = vmatpush1.msra.mxu0 0.0
  %382 = vmatprep.subr.mxu0 0.0
  %383 = vmatpush1.msra.mxu0 0.0
  %384 = vmatprep.subr.mxu0 0.0
  %385 = vmatpush1.msra.mxu0 0.0
  %386 = vmatprep.subr.mxu0 0.0
  %387 = vmatpush1.msra.mxu0 0.0
  %388 = vmatprep.subr.mxu0 0.0
  %389 = vmatpush1.msra.mxu0 0.0
  %390 = vmatprep.subr.mxu0 0.0
  %391 = vmatpush1.msra.mxu0 0.0
  %392 = vmatprep.subr.mxu0 0.0
  %393 = vmatpush1.msra.mxu0 0.0
  %394 = vmatprep.subr.mxu0 0.0
  %395 = vmatpush1.msra.mxu0 0.0
  %396 = vmatprep.subr.mxu0 0.0
  %397 = vmatpush1.msra.mxu0 %v356
  %398 = vmatprep.subr.mxu0 0.0
  %399 = vmatpush1.msra.mxu0 %v355
  %400 = vmatprep.subr.mxu0 0.0
  %401 = vmatpush1.msra.mxu0 %v354
  %402 = vmatprep.subr.mxu0 0.0
  %403 = vmatpush1.msra.mxu0 %v353
  %404 = vmatprep.subr.mxu0 0.0
  %405 = vmatpush2.msra.mxu0 0.0
  %406 = vmatprep.subr.mxu0 0.0
  %407 = vmatpush2.msra.mxu0 0.0
  %408 = vmatprep.subr.mxu0 0.0
  %409 = vmatpush2.msra.mxu0 0.0
  %410 = vmatprep.subr.mxu0 0.0
  %411 = vmatpush2.msra.mxu0 0.0
  %412 = vmatprep.subr.mxu0 0.0
  %413 = vmatpush2.msra.mxu0 0.0
  %414 = vmatprep.subr.mxu0 0.0
  %415 = vmatpush2.msra.mxu0 0.0
  %416 = vmatprep.subr.mxu0 0.0
  %417 = vmatpush2.msra.mxu0 0.0
  %418 = vmatprep.subr.mxu0 0.0
  %419 = vmatpush2.msra.mxu0 0.0
  %420 = vmatprep.subr.mxu0 0.0
  %421 = vmatpush2.msra.mxu0 0.0
  %422 = vmatprep.subr.mxu0 0.0
  %423 = vmatpush2.msra.mxu0 0.0
  %424 = vmatprep.subr.mxu0 0.0
  %425 = vmatpush2.msra.mxu0 0.0
  %426 = vmatprep.subr.mxu0 0.0
  %427 = vmatpush2.msra.mxu0 0.0
  %428 = vmatprep.subr.mxu0 0.0
  %429 = vmatpush2.msra.mxu0 0.0
  %430 = vmatprep.subr.mxu0 0.0
  %431 = vmatpush2.msra.mxu0 0.0
  %432 = vmatprep.subr.mxu0 0.0
  %433 = vmatpush2.msra.mxu0 0.0
  %434 = vmatprep.subr.mxu0 0.0
  %435 = vmatpush2.msra.mxu0 0.0
  %436 = vmatprep.mubr.f32.mxu0 0.0
  %437 = vmatmul.mubr.f32.gmra.mxu0 %v370
  %v438 = vpop.f32.mrf.mxu0
  %v439 = vadd.f32 %v367, %v438
  %v440 = vpop.f32.mrf.mxu0
  %441 = vdwg.mxu0
  %442 = vst [vmem:[%s7] sm:$0x1] %v439
  // Predicated region
  $region30: #{improved_nn_forward.1} parent=0 // pred_check
    _
  $region31: #{improved_nn_forward.1} parent=0 // pred_check_branch
    %444 = sbr.rel (0) target = $region33
  $region32: #{improved_nn_forward.1} parent=0 // pred_region
    _
  $region33: #{improved_nn_forward.1} parent=0 // pred_fallthru
    _
  // Predicated region
  $region34: #{improved_nn_forward.1} parent=0 // pred_check
    _
  $region35: #{improved_nn_forward.1} parent=0 // pred_check_branch
    %446 = sbr.rel (0) target = $region37
  $region36: #{improved_nn_forward.1} parent=0 // pred_region
    _
  $region37: #{improved_nn_forward.1} parent=0 // pred_fallthru
    _

</llo_original>
